<compile_context>
chip_gen: v7x
topology: tpu7x:2x2x1
jax: 0.10.0
libtpu: 0.0.40
codegen_flags: <defaults>
</compile_context>

<pallas_src>
import functools

import jax
import jax.numpy as jnp
from jax import lax
from jax.experimental import pallas as pl
from jax.experimental.pallas import tpu as pltpu


def _pool_out_size(dim, k, s):
    """PyTorch ceil_mode output size (padding=0), with the 'last window must
    start inside the input' correction."""
    o = -(-(dim - k) // s) + 1  # ceil((dim - k) / s) + 1
    if (o - 1) * s >= dim:
        o -= 1
    return o


def _round_up(a, b):
    return -(-a // b) * b


def _padded_block_bytes(shape, itemsize):
    """(8,128)-tiling-aware VMEM footprint of a (..., sublane, lane) block."""
    sub_unit = {4: 8, 2: 16, 1: 32}.get(itemsize, 8)
    lead = 1
    for d in shape[:-2]:
        lead *= d
    return lead * _round_up(shape[-2], sub_unit) * _round_up(shape[-1], 128) * itemsize


def _maxpool_kernel(x_ref, o_ref, *, k, s, H, W, Ho, Wo):
    """x_ref: (H, W, TB)  ->  o_ref: (Ho, Wo, TB).  TB is the lane axis."""
    TB = x_ref.shape[-1]

    Ho_full = min(Ho, (H - k) // s + 1) if H >= k else 0  # rows with fully in-bounds windows
    Wo_full = min(Wo, (W - k) // s + 1) if W >= k else 0  # cols with fully in-bounds windows

    def pool_h(v):
        """Max-pool the outer (H) axis of a (H, w, TB) value -> (Ho, w, TB)."""
        w = v.shape[1]
        parts = []
        if Ho_full > 0:
            if s == k:
                # Non-overlapping windows: outer-dim reshape is free (last two
                # dims untouched), reduction is pure elementwise VPU work.
                blk = v[: Ho_full * k].reshape(Ho_full, k, w, TB)
                m = blk[:, 0]
                for di in range(1, k):
                    m = jnp.maximum(m, blk[:, di])
            else:
                lim = (Ho_full - 1) * s + 1
                m = lax.slice(v, (0, 0, 0), (lim, w, TB), (s, 1, 1))
                for di in range(1, k):
                    m = jnp.maximum(
                        m, lax.slice(v, (di, 0, 0), (di + lim, w, TB), (s, 1, 1))
                    )
            parts.append(m)
        if Ho_full < Ho:
            # Ceil-mode tail row: reduce only over the in-bounds taps.
            start = (Ho - 1) * s
            t = v[start:start + 1]
            for di in range(1, H - start):
                t = jnp.maximum(t, v[start + di:start + di + 1])
            parts.append(t)
        return parts[0] if len(parts) == 1 else jnp.concatenate(parts, axis=0)

    # ---- W direction, fully in-bounds windows: sublane-strided ref taps. ----
    if Wo_full > 0:
        m = x_ref[:, pl.ds(0, Wo_full, stride=s), :]
        for dj in range(1, k):
            m = jnp.maximum(m, x_ref[:, pl.ds(dj, Wo_full, stride=s), :])
        o_ref[:, 0:Wo_full, :] = pool_h(m)

    # ---- W direction, ceil-mode tail window (clipped to the input edge). ----
    if Wo_full < Wo:
        start = (Wo - 1) * s
        t = x_ref[:, pl.ds(start, 1), :]
        for dj in range(1, W - start):
            t = jnp.maximum(t, x_ref[:, pl.ds(start + dj, 1), :])
        o_ref[:, Wo_full:Wo, :] = pool_h(t)


def maxpool2d_ceil(x, kernel_size=3, stride=None, *, vmem_budget_bytes=24 * 1024 * 1024):
    """Reproduces torch.nn.MaxPool2d(kernel_size=3, ceil_mode=True) on NCHW."""
    k = kernel_size
    s = k if stride is None else stride
    N, C, H, W = x.shape
    Ho = _pool_out_size(H, k, s)
    Wo = _pool_out_size(W, k, s)
    NC = N * C
    itemsize = jnp.dtype(x.dtype).itemsize

    # (8,128)-aware footprint of one grid step: double-buffered input/output
    # blocks plus head-room for the stage-1 intermediate and tap temporaries.
    def footprint(tb):
        in_b = _padded_block_bytes((H, W, tb), itemsize)
        out_b = _padded_block_bytes((Ho, Wo, tb), itemsize)
        mid_b = _padded_block_bytes((H, Wo, tb), itemsize)
        return 2 * in_b + 2 * out_b + 2 * mid_b

    LANE = 128
    if NC <= LANE:
        TB = NC  # full-dim lane block (allowed by the (8,128) rule)
    else:
        per_unit = footprint(LANE)
        TB = max(LANE, (vmem_budget_bytes // per_unit) * LANE)
        TB = min(TB, _round_up(NC, LANE))
        # Keep at least 2 grid steps when there is enough work so both v7x
        # TensorCores (dimension_semantics="parallel") are used.
        if NC > 2 * LANE:
            TB = min(TB, max(LANE, _round_up(pl.cdiv(NC, 2), LANE)))

    vmem_limit = int(min(max(48 * 1024 * 1024, footprint(TB) + (8 << 20)),
                         120 * 1024 * 1024))

    # NCHW -> (H, W, N*C): puts the big flattened batch*channel axis on lanes.
    # TODO(synk): in a fused pipeline this input transpose should be absorbed
    # into the producer instead of a standalone XLA transpose.
    x_t = jnp.transpose(x.reshape(NC, H, W), (1, 2, 0))

    kernel = functools.partial(_maxpool_kernel, k=k, s=s, H=H, W=W, Ho=Ho, Wo=Wo)

    out_t = pl.pallas_call(
        kernel,
        out_shape=jax.ShapeDtypeStruct((Ho, Wo, NC), x.dtype),
        grid=(pl.cdiv(NC, TB),),
        in_specs=[pl.BlockSpec((H, W, TB), lambda i: (0, 0, i))],
        out_specs=pl.BlockSpec((Ho, Wo, TB), lambda i: (0, 0, i)),
        compiler_params=pltpu.CompilerParams(
            dimension_semantics=("parallel",),
            vmem_limit_bytes=vmem_limit,
        ),
        cost_estimate=pl.CostEstimate(
            flops=NC * Ho * Wo * k * k,
            transcendentals=0,
            bytes_accessed=NC * (H * W + Ho * Wo) * itemsize,
        ),
    )(x_t)

    # Inverse transpose touches only the pooled tensor (1/9 of the input size).
    return jnp.transpose(out_t, (2, 0, 1)).reshape(N, C, Ho, Wo)


def _reference_maxpool(x, kernel_size=3, stride=None):
    """Pure-JAX reference (reduce_window with ceil-mode style identity padding)."""
    k = kernel_size
    s = k if stride is None else stride
    N, C, H, W = x.shape
    Ho = _pool_out_size(H, k, s)
    Wo = _pool_out_size(W, k, s)
    Hp = (Ho - 1) * s + k
    Wp = (Wo - 1) * s + k
    if jnp.issubdtype(x.dtype, jnp.floating):
        init = jnp.array(-jnp.inf, x.dtype)
    else:
        init = jnp.array(jnp.iinfo(x.dtype).min, x.dtype)
    return lax.reduce_window(
        x,
        init,
        lax.max,
        window_dimensions=(1, 1, k, k),
        window_strides=(1, 1, s, s),
        padding=((0, 0), (0, 0), (0, max(0, Hp - H)), (0, max(0, Wp - W))),
    )


if __name__ == "__main__":
    key = jax.random.PRNGKey(0)
    # Small NCHW input consistent with the module's forward.
    x = jax.random.normal(key, (2, 4, 16, 16), dtype=jnp.float32)

    out = jax.block_until_ready(maxpool2d_ceil(x))

    ref = _reference_maxpool(x)
    assert out.shape == (2, 4, 6, 6), out.shape
    assert jnp.allclose(out, ref), "Pallas maxpool mismatch vs reference"

    print("KERNEL_OK")
</pallas_src>

<mosaic_0001>
module attributes {stable_mosaic.version = 11 : i64} {
  func.func @_maxpool_kernel(%arg0: i32, %arg1: memref<16x16x8xf32, #tpu.memory_space<vmem>>, %arg2: memref<6x6x8xf32, #tpu.memory_space<vmem>>) attributes {dimension_semantics = [#tpu.dimension_semantics<parallel>], iteration_bounds = array<i64: 1>, scalar_prefetch = 0 : i64, scratch_operands = 0 : i64, tpu.core_type = #tpu.core_type<tc>, window_params = [{transform_indices = @transform_0, window_bounds = array<i64: 16, 16, 8>}, {transform_indices = @transform_1, window_bounds = array<i64: 6, 6, 8>}]} {
    %c0 = arith.constant 0 : index
    %c0_0 = arith.constant 0 : index
    %c0_1 = arith.constant 0 : index
    %0 = tpu.strided_load %arg1[%c0, %c0_0, %c0_1] {strides = array<i32: 1, 3, 1>} : memref<16x16x8xf32, #tpu.memory_space<vmem>>, vector<16x5x8xf32>
    %c0_2 = arith.constant 0 : index
    %c1 = arith.constant 1 : index
    %c0_3 = arith.constant 0 : index
    %1 = tpu.strided_load %arg1[%c0_2, %c1, %c0_3] {strides = array<i32: 1, 3, 1>} : memref<16x16x8xf32, #tpu.memory_space<vmem>>, vector<16x5x8xf32>
    %2 = arith.maximumf %0, %1 : vector<16x5x8xf32>
    %c0_4 = arith.constant 0 : index
    %c2 = arith.constant 2 : index
    %c0_5 = arith.constant 0 : index
    %3 = tpu.strided_load %arg1[%c0_4, %c2, %c0_5] {strides = array<i32: 1, 3, 1>} : memref<16x16x8xf32, #tpu.memory_space<vmem>>, vector<16x5x8xf32>
    %4 = arith.maximumf %2, %3 : vector<16x5x8xf32>
    %5 = vector.extract_strided_slice %4 {offsets = [0, 0, 0], sizes = [15, 5, 8], strides = [1, 1, 1]} : vector<16x5x8xf32> to vector<15x5x8xf32>
    %6 = vector.shape_cast %5 : vector<15x5x8xf32> to vector<5x3x5x8xf32>
    %7 = vector.extract_strided_slice %6 {offsets = [0, 0, 0, 0], sizes = [5, 1, 5, 8], strides = [1, 1, 1, 1]} : vector<5x3x5x8xf32> to vector<5x1x5x8xf32>
    %8 = vector.shape_cast %7 : vector<5x1x5x8xf32> to vector<5x5x8xf32>
    %9 = vector.extract_strided_slice %6 {offsets = [0, 1, 0, 0], sizes = [5, 1, 5, 8], strides = [1, 1, 1, 1]} : vector<5x3x5x8xf32> to vector<5x1x5x8xf32>
    %10 = vector.shape_cast %9 : vector<5x1x5x8xf32> to vector<5x5x8xf32>
    %11 = arith.maximumf %8, %10 : vector<5x5x8xf32>
    %12 = vector.extract_strided_slice %6 {offsets = [0, 2, 0, 0], sizes = [5, 1, 5, 8], strides = [1, 1, 1, 1]} : vector<5x3x5x8xf32> to vector<5x1x5x8xf32>
    %13 = vector.shape_cast %12 : vector<5x1x5x8xf32> to vector<5x5x8xf32>
    %14 = arith.maximumf %11, %13 : vector<5x5x8xf32>
    %15 = vector.extract_strided_slice %4 {offsets = [15, 0, 0], sizes = [1, 5, 8], strides = [1, 1, 1]} : vector<16x5x8xf32> to vector<1x5x8xf32>
    %16 = tpu.concatenate %14, %15 in 0 : vector<5x5x8xf32>, vector<1x5x8xf32> -> vector<6x5x8xf32>
    %c0_6 = arith.constant 0 : index
    %c0_7 = arith.constant 0 : index
    %c0_8 = arith.constant 0 : index
    %17 = vector.load %arg2[%c0_6, %c0_7, %c0_8] : memref<6x6x8xf32, #tpu.memory_space<vmem>>, vector<6x5x8xf32>
    tpu.vector_store %arg2[%c0_6, %c0_7, %c0_8], %16 {strides = array<i32>} : memref<6x6x8xf32, #tpu.memory_space<vmem>>, vector<6x5x8xf32>,
    %c0_9 = arith.constant 0 : index
    %c15 = arith.constant 15 : index
    %c0_10 = arith.constant 0 : index
    %18 = vector.load %arg1[%c0_9, %c15, %c0_10] : memref<16x16x8xf32, #tpu.memory_space<vmem>>, vector<16x1x8xf32>
    %19 = vector.extract_strided_slice %18 {offsets = [0, 0, 0], sizes = [15, 1, 8], strides = [1, 1, 1]} : vector<16x1x8xf32> to vector<15x1x8xf32>
    %20 = vector.shape_cast %19 : vector<15x1x8xf32> to vector<5x3x1x8xf32>
    %21 = vector.extract_strided_slice %20 {offsets = [0, 0, 0, 0], sizes = [5, 1, 1, 8], strides = [1, 1, 1, 1]} : vector<5x3x1x8xf32> to vector<5x1x1x8xf32>
    %22 = vector.shape_cast %21 : vector<5x1x1x8xf32> to vector<5x1x8xf32>
    %23 = vector.extract_strided_slice %20 {offsets = [0, 1, 0, 0], sizes = [5, 1, 1, 8], strides = [1, 1, 1, 1]} : vector<5x3x1x8xf32> to vector<5x1x1x8xf32>
    %24 = vector.shape_cast %23 : vector<5x1x1x8xf32> to vector<5x1x8xf32>
    %25 = arith.maximumf %22, %24 : vector<5x1x8xf32>
    %26 = vector.extract_strided_slice %20 {offsets = [0, 2, 0, 0], sizes = [5, 1, 1, 8], strides = [1, 1, 1, 1]} : vector<5x3x1x8xf32> to vector<5x1x1x8xf32>
    %27 = vector.shape_cast %26 : vector<5x1x1x8xf32> to vector<5x1x8xf32>
    %28 = arith.maximumf %25, %27 : vector<5x1x8xf32>
    %29 = vector.extract_strided_slice %18 {offsets = [15, 0, 0], sizes = [1, 1, 8], strides = [1, 1, 1]} : vector<16x1x8xf32> to vector<1x1x8xf32>
    %30 = tpu.concatenate %28, %29 in 0 : vector<5x1x8xf32>, vector<1x1x8xf32> -> vector<6x1x8xf32>
    %c0_11 = arith.constant 0 : index
    %c5 = arith.constant 5 : index
    %c0_12 = arith.constant 0 : index
    %31 = vector.load %arg2[%c0_11, %c5, %c0_12] : memref<6x6x8xf32, #tpu.memory_space<vmem>>, vector<6x1x8xf32>
    tpu.vector_store %arg2[%c0_11, %c5, %c0_12], %30 {strides = array<i32>} : memref<6x6x8xf32, #tpu.memory_space<vmem>>, vector<6x1x8xf32>,
    return
  }
  func.func @transform_0(%arg0: i32) -> (i32, i32, i32) {
    %c0_i32 = arith.constant 0 : i32
    %c0_i32_0 = arith.constant 0 : i32
    %c0_i32_1 = arith.constant 0 : i32
    return %c0_i32, %c0_i32_0, %arg0 : i32, i32, i32
  }
  func.func @transform_1(%arg0: i32) -> (i32, i32, i32) {
    %c0_i32 = arith.constant 0 : i32
    %c0_i32_0 = arith.constant 0 : i32
    %c0_i32_1 = arith.constant 0 : i32
    return %c0_i32, %c0_i32_0, %arg0 : i32, i32, i32
  }
}

</mosaic_0001>

<llo_original>
// kernel: tpu_custom_call.1
$region0: #{tpu_custom_call.1}
  #allocation0 [shape = 'u32[]', space=smem, size = 0x4, offset = 0x4, fixed_abs, tag = 'smem constant byte address 0x4 - core index']
  #allocation1 [shape = 'u32[144,128]{1,0:T(1,128)}', space=vmem, size = 0x12000, scoped, tag = 'internal scratch']
  %s0 = inlined_call_operand.vmem [shape: f32[16,16,8], index: 0, kind: input, shape index: {}]
  %s1 = inlined_call_operand.hbm [shape: f32[6,6,8], index: 1, kind: output, shape index: {}]
  %s2 = sld [smem:[#allocation0]]
  $region14: #{tpu_custom_call.1} parent=0
    _
  %s4 = ssub.s32 1, %s2
  %s5 = scalar_select 0, %s4, %s2
  $region1: #{tpu_custom_call.1} parent=0
    #allocation2 [shape = 'u8[24576]{0}', space=vmem, size = 0x6000, scoped, tag = 'output window, operand 0, single buffered']
    #allocation3 [shape = 's32[1]{0}', space=sflag, size = 0x4, scoped, tag = 'scoped memory for tpu_custom_call.1']
    %6 = vsyncpa [#allocation3], 0
    // Predicated region
    $region2: #{tpu_custom_call.1} parent=1 // pred_check
      _
    $region3: #{tpu_custom_call.1} parent=1 // pred_check_branch
      %8 = sbr.rel (0) target = $region5
    $region4: #{tpu_custom_call.1} parent=1 // pred_region
      _
    $region5: #{tpu_custom_call.1} parent=1 // pred_fallthru
      _
    %v9 = vld [vmem:[%s0] ss:$3 sm:$0x1f]
    %s10 = scalar_lea.vmem %s0, 16
    %v11 = vld [vmem:[%s10] ss:$3 sm:$0x1f]
    %s12 = scalar_lea.vmem %s0, 32
    %v13 = vld [vmem:[%s12] ss:$3 sm:$0x1f]
    %s14 = scalar_lea.vmem %s0, 48
    %v15 = vld [vmem:[%s14] ss:$3 sm:$0x1f]
    %s16 = scalar_lea.vmem %s0, 64
    %v17 = vld [vmem:[%s16] ss:$3 sm:$0x1f]
    %s18 = scalar_lea.vmem %s0, 80
    %v19 = vld [vmem:[%s18] ss:$3 sm:$0x1f]
    %s20 = scalar_lea.vmem %s0, 96
    %v21 = vld [vmem:[%s20] ss:$3 sm:$0x1f]
    %s22 = scalar_lea.vmem %s0, 112
    %v23 = vld [vmem:[%s22] ss:$3 sm:$0x1f]
    %s24 = scalar_lea.vmem %s0, 128
    %v25 = vld [vmem:[%s24] ss:$3 sm:$0x1f]
    %s26 = scalar_lea.vmem %s0, 144
    %v27 = vld [vmem:[%s26] ss:$3 sm:$0x1f]
    %s28 = scalar_lea.vmem %s0, 160
    %v29 = vld [vmem:[%s28] ss:$3 sm:$0x1f]
    %s30 = scalar_lea.vmem %s0, 176
    %v31 = vld [vmem:[%s30] ss:$3 sm:$0x1f]
    %s32 = scalar_lea.vmem %s0, 192
    %v33 = vld [vmem:[%s32] ss:$3 sm:$0x1f]
    %s34 = scalar_lea.vmem %s0, 208
    %v35 = vld [vmem:[%s34] ss:$3 sm:$0x1f]
    %s36 = scalar_lea.vmem %s0, 224
    %v37 = vld [vmem:[%s36] ss:$3 sm:$0x1f]
    %s38 = scalar_lea.vmem %s0, 240
    %v39 = vld [vmem:[%s38] ss:$3 sm:$0x1f]
    %s40 = scalar_lea.vmem %s0, 1
    %v41 = vld [vmem:[%s40] ss:$3 sm:$0x1f]
    %s42 = scalar_lea.vmem %s0, 17
    %v43 = vld [vmem:[%s42] ss:$3 sm:$0x1f]
    %s44 = scalar_lea.vmem %s0, 33
    %v45 = vld [vmem:[%s44] ss:$3 sm:$0x1f]
    %s46 = scalar_lea.vmem %s0, 49
    %v47 = vld [vmem:[%s46] ss:$3 sm:$0x1f]
    %s48 = scalar_lea.vmem %s0, 65
    %v49 = vld [vmem:[%s48] ss:$3 sm:$0x1f]
    %s50 = scalar_lea.vmem %s0, 81
    %v51 = vld [vmem:[%s50] ss:$3 sm:$0x1f]
    %s52 = scalar_lea.vmem %s0, 97
    %v53 = vld [vmem:[%s52] ss:$3 sm:$0x1f]
    %s54 = scalar_lea.vmem %s0, 113
    %v55 = vld [vmem:[%s54] ss:$3 sm:$0x1f]
    %s56 = scalar_lea.vmem %s0, 129
    %v57 = vld [vmem:[%s56] ss:$3 sm:$0x1f]
    %s58 = scalar_lea.vmem %s0, 145
    %v59 = vld [vmem:[%s58] ss:$3 sm:$0x1f]
    %s60 = scalar_lea.vmem %s0, 161
    %v61 = vld [vmem:[%s60] ss:$3 sm:$0x1f]
    %s62 = scalar_lea.vmem %s0, 177
    %v63 = vld [vmem:[%s62] ss:$3 sm:$0x1f]
    %s64 = scalar_lea.vmem %s0, 193
    %v65 = vld [vmem:[%s64] ss:$3 sm:$0x1f]
    %s66 = scalar_lea.vmem %s0, 209
    %v67 = vld [vmem:[%s66] ss:$3 sm:$0x1f]
    %s68 = scalar_lea.vmem %s0, 225
    %v69 = vld [vmem:[%s68] ss:$3 sm:$0x1f]
    %s70 = scalar_lea.vmem %s0, 241
    %v71 = vld [vmem:[%s70] ss:$3 sm:$0x1f]
    %v72 = vmax.f32 %v9, %v41
    %v73 = vmax.f32 %v11, %v43
    %v74 = vmax.f32 %v13, %v45
    %v75 = vmax.f32 %v15, %v47
    %v76 = vmax.f32 %v17, %v49
    %v77 = vmax.f32 %v19, %v51
    %v78 = vmax.f32 %v21, %v53
    %v79 = vmax.f32 %v23, %v55
    %v80 = vmax.f32 %v25, %v57
    %v81 = vmax.f32 %v27, %v59
    %v82 = vmax.f32 %v29, %v61
    %v83 = vmax.f32 %v31, %v63
    %v84 = vmax.f32 %v33, %v65
    %v85 = vmax.f32 %v35, %v67
    %v86 = vmax.f32 %v37, %v69
    %v87 = vmax.f32 %v39, %v71
    %s88 = scalar_lea.vmem %s0, 2
    %v89 = vld [vmem:[%s88] ss:$3 sm:$0x1f]
    %s90 = scalar_lea.vmem %s0, 18
    %v91 = vld [vmem:[%s90] ss:$3 sm:$0x1f]
    %s92 = scalar_lea.vmem %s0, 34
    %v93 = vld [vmem:[%s92] ss:$3 sm:$0x1f]
    %s94 = scalar_lea.vmem %s0, 50
    %v95 = vld [vmem:[%s94] ss:$3 sm:$0x1f]
    %s96 = scalar_lea.vmem %s0, 66
    %v97 = vld [vmem:[%s96] ss:$3 sm:$0x1f]
    %s98 = scalar_lea.vmem %s0, 82
    %v99 = vld [vmem:[%s98] ss:$3 sm:$0x1f]
    %s100 = scalar_lea.vmem %s0, 98
    %v101 = vld [vmem:[%s100] ss:$3 sm:$0x1f]
    %s102 = scalar_lea.vmem %s0, 114
    %v103 = vld [vmem:[%s102] ss:$3 sm:$0x1f]
    %s104 = scalar_lea.vmem %s0, 130
    %v105 = vld [vmem:[%s104] ss:$3 sm:$0x1f]
    %s106 = scalar_lea.vmem %s0, 146
    %v107 = vld [vmem:[%s106] ss:$3 sm:$0x1f]
    %s108 = scalar_lea.vmem %s0, 162
    %v109 = vld [vmem:[%s108] ss:$3 sm:$0x1f]
    %s110 = scalar_lea.vmem %s0, 178
    %v111 = vld [vmem:[%s110] ss:$3 sm:$0x1f]
    %s112 = scalar_lea.vmem %s0, 194
    %v113 = vld [vmem:[%s112] ss:$3 sm:$0x1f]
    %s114 = scalar_lea.vmem %s0, 210
    %v115 = vld [vmem:[%s114] ss:$3 sm:$0x1f]
    %s116 = scalar_lea.vmem %s0, 226
    %v117 = vld [vmem:[%s116] ss:$3 sm:$0x1f]
    %s118 = scalar_lea.vmem %s0, 242
    %v119 = vld [vmem:[%s118] ss:$3 sm:$0x1f]
    %v120 = vmax.f32 %v72, %v89
    %v121 = vmax.f32 %v73, %v91
    %v122 = vmax.f32 %v74, %v93
    %v123 = vmax.f32 %v75, %v95
    %v124 = vmax.f32 %v76, %v97
    %v125 = vmax.f32 %v77, %v99
    %v126 = vmax.f32 %v78, %v101
    %v127 = vmax.f32 %v79, %v103
    %v128 = vmax.f32 %v80, %v105
    %v129 = vmax.f32 %v81, %v107
    %v130 = vmax.f32 %v82, %v109
    %v131 = vmax.f32 %v83, %v111
    %v132 = vmax.f32 %v84, %v113
    %v133 = vmax.f32 %v85, %v115
    %v134 = vmax.f32 %v86, %v117
    %v135 = vmax.f32 %v87, %v119
    %v136 = vmax.f32 %v120, %v121
    %v137 = vmax.f32 %v123, %v124
    %v138 = vmax.f32 %v126, %v127
    %v139 = vmax.f32 %v129, %v130
    %v140 = vmax.f32 %v132, %v133
    %v141 = vmax.f32 %v136, %v122
    %v142 = vmax.f32 %v137, %v125
    %v143 = vmax.f32 %v138, %v128
    %v144 = vmax.f32 %v139, %v131
    %v145 = vmax.f32 %v140, %v134
    %vm146 = vcmask 61440
    %147 = vst.msk [vmem:[#allocation2] sm:$0x1f] %vm146, %v141
    %148 = vst.msk [vmem:[#allocation2 + $0x8] sm:$0x1f] %vm146, %v142
    %149 = vst.msk [vmem:[#allocation2 + $0x10] sm:$0x1f] %vm146, %v143
    %150 = vst.msk [vmem:[#allocation2 + $0x18] sm:$0x1f] %vm146, %v144
    %151 = vst.msk [vmem:[#allocation2 + $0x20] sm:$0x1f] %vm146, %v145
    %152 = vst.msk [vmem:[#allocation2 + $0x28] sm:$0x1f] %vm146, %v135
    %v153 = vld [vmem:[%s0 + $0xf] sm:$0x1]
    %v154 = vld [vmem:[%s0 + $0x1f] sm:$0x1]
    %v155 = vld [vmem:[%s0 + $0x2f] sm:$0x1]
    %v156 = vld [vmem:[%s0 + $0x3f] sm:$0x1]
    %v157 = vld [vmem:[%s0 + $0x4f] sm:$0x1]
    %v158 = vld [vmem:[%s0 + $0x5f] sm:$0x1]
    %v159 = vld [vmem:[%s0 + $0x6f] sm:$0x1]
    %v160 = vld [vmem:[%s0 + $0x7f] sm:$0x1]
    %v161 = vld [vmem:[%s0 + $0x8f] sm:$0x1]
    %v162 = vld [vmem:[%s0 + $0x9f] sm:$0x1]
    %v163 = vld [vmem:[%s0 + $0xaf] sm:$0x1]
    %v164 = vld [vmem:[%s0 + $0xbf] sm:$0x1]
    %v165 = vld [vmem:[%s0 + $0xcf] sm:$0x1]
    %v166 = vld [vmem:[%s0 + $0xdf] sm:$0x1]
    %v167 = vld [vmem:[%s0 + $0xef] sm:$0x1]
    %v168 = vld [vmem:[%s0 + $0xff] sm:$0x1]
    %v169 = vmax.f32 %v153, %v154
    %v170 = vmax.f32 %v156, %v157
    %v171 = vmax.f32 %v159, %v160
    %v172 = vmax.f32 %v162, %v163
    %v173 = vmax.f32 %v165, %v166
    %v174 = vmax.f32 %v169, %v155
    %v175 = vmax.f32 %v170, %v158
    %v176 = vmax.f32 %v171, %v161
    %v177 = vmax.f32 %v172, %v164
    %v178 = vmax.f32 %v173, %v167
    %vm179 = vcmask 57344
    %180 = vst.msk [vmem:[#allocation2 + $0x5] sm:$0x1] %vm179, %v174
    %181 = vst.msk [vmem:[#allocation2 + $0xd] sm:$0x1] %vm179, %v175
    %182 = vst.msk [vmem:[#allocation2 + $0x15] sm:$0x1] %vm179, %v176
    %183 = vst.msk [vmem:[#allocation2 + $0x1d] sm:$0x1] %vm179, %v177
    %184 = vst.msk [vmem:[#allocation2 + $0x25] sm:$0x1] %vm179, %v178
    %185 = vst.msk [vmem:[#allocation2 + $0x2d] sm:$0x1] %vm179, %v168
    // Predicated region
    $region6: #{tpu_custom_call.1} parent=1 // pred_check
      _
    $region7: #{tpu_custom_call.1} parent=1 // pred_check_branch
      %187 = sbr.rel (0) target = $region9
    $region8: #{tpu_custom_call.1} parent=1 // pred_region
      %s189 = ssub.s32 768, 768
      %190 = vsyncadd [#allocation3], %s189
      %s191 = sshll.u32 [#allocation2], 4
      %s192 = int_to_ptr.vmem [resolvable:$true] %s191
      %197 = dma.vmem_to_hbm [thread:$0]  %s192, 768, %s1, [#allocation3], 128, 128, 8
    $region9: #{tpu_custom_call.1} parent=1 // pred_fallthru
      _
    // Predicated region
    $region10: #{tpu_custom_call.1} parent=1 // pred_check
      _
    $region11: #{tpu_custom_call.1} parent=1 // pred_check_branch
      %199 = sbr.rel (0) target = $region13
    $region12: #{tpu_custom_call.1} parent=1 // pred_region
      %200 = dma.done [#allocation3], 768
    $region13: #{tpu_custom_call.1} parent=1 // pred_fallthru
      _
    %201 = vsyncpa [#allocation3], 1

</llo_original>
